<compile_context>
chip_gen: v6e
topology: v6e:2x2x1
jax: 0.10.0
libtpu: 0.0.40
codegen_flags: <defaults>
</compile_context>

<pallas_src>
import functools

import jax
import jax.numpy as jnp
from jax import lax
from jax.experimental import pallas as pl
from jax.experimental.pallas import tpu as pltpu


IN_FEATURES = 3 * 28 * 28      # 2352
H1, H2, FEAT = 50, 50, 16

# Row offsets of w2 / w3 / wc inside the packed bf16 weight slab (multiples of
# the bf16 sublane quantum 16, so the static in-kernel slices are aligned).
_W2_ROW, _W3_ROW, _WC_ROW = 0, 64, 128
_SLAB_ROWS, _SLAB_COLS = 144, 128

_NT_DIMS = (((1,), (1,)), ((), ()))   # contract minor dims of both operands


def _round_up(x, m):
    return ((x + m - 1) // m) * m


def _mlp_kernel(x_ref, w1t_ref, slab_ref, bias_ref, out_ref, *, num_classes):
    # Whole problem sits in VMEM; 3x(Linear+ReLU) + classifier fused.
    x = x_ref[...]                                             # (tb, 2352) bf16

    # h1 = (x/255) @ W1 + b1 ; scale folded into w1t, w1t stored as (H1, IN).
    h1 = lax.dot_general(x, w1t_ref[...], dimension_numbers=_NT_DIMS,
                         preferred_element_type=jnp.float32)
    h1 = jnp.maximum(h1 + bias_ref[0:1, 0:H1], 0.0).astype(jnp.bfloat16)

    w2 = slab_ref[_W2_ROW:_W2_ROW + H1, 0:H2]
    h2 = jnp.dot(h1, w2, preferred_element_type=jnp.float32)
    h2 = jnp.maximum(h2 + bias_ref[1:2, 0:H2], 0.0).astype(jnp.bfloat16)

    w3 = slab_ref[_W3_ROW:_W3_ROW + H2, 0:FEAT]
    feat = jnp.dot(h2, w3, preferred_element_type=jnp.float32)
    feat = jnp.maximum(feat + bias_ref[2:3, 0:FEAT], 0.0)       # (tb, 16) f32

    wc = slab_ref[_WC_ROW:_WC_ROW + FEAT, 0:num_classes]
    logits = (jnp.dot(feat.astype(jnp.bfloat16), wc,
                      preferred_element_type=jnp.float32)
              + bias_ref[3:4, 0:num_classes])                  # (tb, nc) f32

    # Packed lane-dense output slab: feat in cols [0,16), logits in
    # [16, 16+nc).  Lanes beyond that are never read by the wrapper.
    out_ref[:, 0:FEAT] = feat
    out_ref[:, FEAT:FEAT + num_classes] = logits


def pack_params(params):
    """One-time repack of the PyTorch-style parameters for the kernel:
    * w1 stored transposed (H1, IN) bf16 with the 1/255 input scale folded in
      (lane-dense HBM layout; no 50->128 minor-dim padding).
    * w2/w3/wc concatenated into a single bf16 slab.
    * all biases packed into one (4, 128) f32 array."""
    w1, b1, w2, b2, w3, b3, wc, bc = params
    num_classes = wc.shape[1]
    assert H1 <= _SLAB_COLS and H2 <= _SLAB_COLS and num_classes <= _SLAB_COLS
    assert FEAT + num_classes <= 128, "packed output slab needs feat+classes <= 128"

    w1t = (w1 * (1.0 / 255.0)).T.astype(jnp.bfloat16)          # (50, 2352)

    slab = jnp.zeros((_SLAB_ROWS, _SLAB_COLS), jnp.bfloat16)
    slab = slab.at[_W2_ROW:_W2_ROW + H1, 0:H2].set(w2.astype(jnp.bfloat16))
    slab = slab.at[_W3_ROW:_W3_ROW + H2, 0:FEAT].set(w3.astype(jnp.bfloat16))
    slab = slab.at[_WC_ROW:_WC_ROW + FEAT, 0:num_classes].set(
        wc.astype(jnp.bfloat16))

    bias = jnp.zeros((4, 128), jnp.float32)
    bias = bias.at[0, 0:H1].set(b1)
    bias = bias.at[1, 0:H2].set(b2)
    bias = bias.at[2, 0:FEAT].set(b3)
    bias = bias.at[3, 0:num_classes].set(bc)

    return w1t, slab, bias, num_classes


def _choose_blocks(B):
    """Minimal batch padding (bf16 sublane quantum = 16) with >=2 blocks when
    B > 256 (keeps both v7x TensorCores busy) and a 512-row tile cap (~85% of
    HBM roofline; fits v5e's 16 MiB scoped-VMEM default)."""
    if B <= 256:
        num_blocks = 1
    else:
        num_blocks = max(2, -(-B // 512))
        if num_blocks % 2:
            num_blocks += 1                       # balance the 2 v7x cores
    tb = _round_up(max(-(-B // num_blocks), 16), 16)
    return tb, num_blocks


def mlp_disentangle_easy_forward(x_nchw, packed, mode=None, return_feat=False):
    """x_nchw: (B, 3, 28, 28).  Returns logits (B, num_classes); with
    return_feat=True returns (logits, feat); mode in {'tsne','mixup'} returns
    (feat, logits) — mirroring the PyTorch module's forward."""
    w1t, slab, bias, num_classes = packed
    B = x_nchw.shape[0]
    # 1/255 scale is folded into w1t; integer pixel values are exact in bf16.
    x_flat = x_nchw.reshape(B, -1).astype(jnp.bfloat16)        # == x.view(B,-1)

    tb, num_blocks = _choose_blocks(B)
    b_pad = tb * num_blocks
    if b_pad != B:
        x_flat = jnp.pad(x_flat, ((0, b_pad - B), (0, 0)))

    flops = 2 * b_pad * (IN_FEATURES * H1 + H1 * H2 + H2 * FEAT
                         + FEAT * num_classes)
    # Padded/tiled HBM sizes (lane dim padded to 128 multiples, bf16 sublane 16).
    in_lanes = _round_up(IN_FEATURES, 128)                     # 2432
    bytes_accessed = (b_pad * in_lanes * 2                     # x (bf16)
                      + _round_up(H1, 16) * in_lanes * 2       # w1t (bf16)
                      + _SLAB_ROWS * _SLAB_COLS * 2            # w2/w3/wc slab
                      + 8 * 128 * 4                            # biases
                      + b_pad * 128 * 4)                       # packed output
    cost = pl.CostEstimate(flops=flops, transcendentals=0,
                           bytes_accessed=bytes_accessed)

    kernel = functools.partial(_mlp_kernel, num_classes=num_classes)

    out = pl.pallas_call(
        kernel,
        out_shape=jax.ShapeDtypeStruct((b_pad, 128), jnp.float32),
        grid=(num_blocks,),
        in_specs=[
            pl.BlockSpec((tb, IN_FEATURES), lambda i: (i, 0)),         # x tile
            pl.BlockSpec((H1, IN_FEATURES), lambda i: (0, 0)),         # w1t (resident)
            pl.BlockSpec((_SLAB_ROWS, _SLAB_COLS), lambda i: (0, 0)),  # w2/w3/wc slab
            pl.BlockSpec((4, 128), lambda i: (0, 0)),                  # biases
        ],
        out_specs=pl.BlockSpec((tb, 128), lambda i: (i, 0)),           # feat|logits
        compiler_params=pltpu.CompilerParams(
            dimension_semantics=(("parallel",) if num_blocks > 1
                                 else ("arbitrary",)),
            vmem_limit_bytes=32 * 1024 * 1024),
        cost_estimate=cost,
    )(x_flat, w1t, slab, bias)

    feat = out[:B, 0:FEAT]
    logits = out[:B, FEAT:FEAT + num_classes]
    if mode == 'tsne' or mode == 'mixup':
        return feat, logits
    if return_feat:
        return logits, feat
    return logits


def init_params(key, num_classes=10):
    """Deterministic init mimicking PyTorch Linear default (U(-1/sqrt(fan_in), +))."""
    def linear(key, fan_in, fan_out):
        kw, kb = jax.random.split(key)
        bound = 1.0 / jnp.sqrt(fan_in)
        w = jax.random.uniform(kw, (fan_in, fan_out), jnp.float32, -bound, bound)
        b = jax.random.uniform(kb, (fan_out,), jnp.float32, -bound, bound)
        return w, b

    k1, k2, k3, k4 = jax.random.split(key, 4)
    w1, b1 = linear(k1, IN_FEATURES, H1)
    w2, b2 = linear(k2, H1, H2)
    w3, b3 = linear(k3, H2, FEAT)
    wc, bc = linear(k4, FEAT, num_classes)    # fc2 / classifier head
    return (w1, b1, w2, b2, w3, b3, wc, bc)


def _reference(x, params, w1t):
    """Plain-JAX reference using the SAME bf16 operand formulation the kernel
    uses (x bf16, 1/255 folded into the transposed w1), so the check isolates
    the Pallas lowering."""
    _, b1, w2, b2, w3, b3, wc, bc = params
    B = x.shape[0]
    to16 = lambda a: a.astype(jnp.bfloat16)
    xb = x.reshape(B, -1).astype(jnp.bfloat16)
    h = lax.dot_general(xb, w1t, dimension_numbers=_NT_DIMS,
                        preferred_element_type=jnp.float32)
    h = jnp.maximum(h + b1, 0.0)
    h = jnp.dot(to16(h), to16(w2), preferred_element_type=jnp.float32)
    h = jnp.maximum(h + b2, 0.0)
    f = jnp.dot(to16(h), to16(w3), preferred_element_type=jnp.float32)
    f = jnp.maximum(f + b3, 0.0)
    lg = jnp.dot(to16(f), to16(wc), preferred_element_type=jnp.float32) + bc
    return lg, f


if __name__ == "__main__":
    key = jax.random.PRNGKey(0)
    kx, kp, kx2 = jax.random.split(key, 3)

    num_classes = 10
    params = init_params(kp, num_classes=num_classes)
    packed = pack_params(params)
    w1t = packed[0]

    # --- tiny batch (single block, latency path) ---
    B = 2
    x = jax.random.uniform(kx, (B, 3, 28, 28), jnp.float32, 0.0, 255.0)
    logits, feat = mlp_disentangle_easy_forward(x, packed, return_feat=True)
    logits = jax.block_until_ready(logits)

    logits_ref, feat_ref = _reference(x, params, w1t)
    assert logits.shape == (B, num_classes)
    assert feat.shape == (B, FEAT)
    assert jnp.allclose(feat, feat_ref, atol=2e-3, rtol=2e-3)
    assert jnp.allclose(logits, logits_ref, atol=2e-3, rtol=2e-3)

    # --- multi-block batch (exercises the grid / parallel path) ---
    B2 = 300
    x2 = jax.random.uniform(kx2, (B2, 3, 28, 28), jnp.float32, 0.0, 255.0)
    logits2 = mlp_disentangle_easy_forward(x2, packed)
    logits2 = jax.block_until_ready(logits2)
    logits2_ref, _ = _reference(x2, params, w1t)
    assert logits2.shape == (B2, num_classes)
    assert jnp.allclose(logits2, logits2_ref, atol=2e-3, rtol=2e-3)

    print("KERNEL_OK")
</pallas_src>

<mosaic_0001>
module attributes {stable_mosaic.version = 11 : i64} {
  func.func @_mlp_kernel(%arg0: i32, %arg1: memref<16x2352xbf16, #tpu.memory_space<vmem>>, %arg2: memref<50x2352xbf16, #tpu.memory_space<vmem>>, %arg3: memref<144x128xbf16, #tpu.memory_space<vmem>>, %arg4: memref<4x128xf32, #tpu.memory_space<vmem>>, %arg5: memref<16x128xf32, #tpu.memory_space<vmem>>) attributes {dimension_semantics = [#tpu.dimension_semantics<arbitrary>], iteration_bounds = array<i64: 1>, scalar_prefetch = 0 : i64, scratch_operands = 0 : i64, tpu.core_type = #tpu.core_type<tc>, window_params = [{transform_indices = @transform_0, window_bounds = array<i64: 16, 2352>}, {pipeline_mode = #tpu.pipeline_mode<synchronous>, transform_indices = @transform_1, window_bounds = array<i64: 50, 2352>}, {pipeline_mode = #tpu.pipeline_mode<synchronous>, transform_indices = @transform_2, window_bounds = array<i64: 144, 128>}, {pipeline_mode = #tpu.pipeline_mode<synchronous>, transform_indices = @transform_3, window_bounds = array<i64: 4, 128>}, {transform_indices = @transform_4, window_bounds = array<i64: 16, 128>}]} {
    %c0 = arith.constant 0 : index
    %c0_0 = arith.constant 0 : index
    %0 = vector.load %arg1[%c0, %c0_0] : memref<16x2352xbf16, #tpu.memory_space<vmem>>, vector<16x2352xbf16>
    %c0_1 = arith.constant 0 : index
    %c0_2 = arith.constant 0 : index
    %1 = vector.load %arg2[%c0_1, %c0_2] : memref<50x2352xbf16, #tpu.memory_space<vmem>>, vector<50x2352xbf16>
    %cst = arith.constant dense<0.000000e+00> : vector<16x50xf32>
    %2 = tpu.matmul %0, %1, %cst {dimension_numbers = #tpu.dot_dimension_numbers<[1], [1], [0], [0], [0, 0, 1, 0], [], []>} : vector<16x2352xbf16>, vector<50x2352xbf16>, vector<16x50xf32> -> vector<16x50xf32>
    %c0_3 = arith.constant 0 : index
    %c0_4 = arith.constant 0 : index
    %3 = vector.load %arg4[%c0_3, %c0_4] : memref<4x128xf32, #tpu.memory_space<vmem>>, vector<1x50xf32>
    %4 = vector.broadcast %3 : vector<1x50xf32> to vector<16x50xf32>
    %5 = arith.addf %2, %4 : vector<16x50xf32>
    %cst_5 = arith.constant 0.000000e+00 : f32
    %6 = vector.broadcast %cst_5 : f32 to vector<16x50xf32>
    %7 = arith.maximumf %5, %6 : vector<16x50xf32>
    %8 = arith.truncf %7 : vector<16x50xf32> to vector<16x50xbf16>
    %c0_6 = arith.constant 0 : index
    %c0_7 = arith.constant 0 : index
    %9 = vector.load %arg3[%c0_6, %c0_7] : memref<144x128xbf16, #tpu.memory_space<vmem>>, vector<50x50xbf16>
    %cst_8 = arith.constant dense<0.000000e+00> : vector<16x50xf32>
    %10 = tpu.matmul %8, %9, %cst_8 {dimension_numbers = #tpu.dot_dimension_numbers<[1], [0], [0], [1], [0, 0, 1, 1], [], []>} : vector<16x50xbf16>, vector<50x50xbf16>, vector<16x50xf32> -> vector<16x50xf32>
    %c1 = arith.constant 1 : index
    %c0_9 = arith.constant 0 : index
    %11 = vector.load %arg4[%c1, %c0_9] : memref<4x128xf32, #tpu.memory_space<vmem>>, vector<1x50xf32>
    %12 = vector.broadcast %11 : vector<1x50xf32> to vector<16x50xf32>
    %13 = arith.addf %10, %12 : vector<16x50xf32>
    %cst_10 = arith.constant 0.000000e+00 : f32
    %14 = vector.broadcast %cst_10 : f32 to vector<16x50xf32>
    %15 = arith.maximumf %13, %14 : vector<16x50xf32>
    %16 = arith.truncf %15 : vector<16x50xf32> to vector<16x50xbf16>
    %c64 = arith.constant 64 : index
    %c0_11 = arith.constant 0 : index
    %17 = vector.load %arg3[%c64, %c0_11] : memref<144x128xbf16, #tpu.memory_space<vmem>>, vector<50x16xbf16>
    %cst_12 = arith.constant dense<0.000000e+00> : vector<16x16xf32>
    %18 = tpu.matmul %16, %17, %cst_12 {dimension_numbers = #tpu.dot_dimension_numbers<[1], [0], [0], [1], [0, 0, 1, 1], [], []>} : vector<16x50xbf16>, vector<50x16xbf16>, vector<16x16xf32> -> vector<16x16xf32>
    %c2 = arith.constant 2 : index
    %c0_13 = arith.constant 0 : index
    %19 = vector.load %arg4[%c2, %c0_13] : memref<4x128xf32, #tpu.memory_space<vmem>>, vector<1x16xf32>
    %20 = vector.broadcast %19 : vector<1x16xf32> to vector<16x16xf32>
    %21 = arith.addf %18, %20 : vector<16x16xf32>
    %cst_14 = arith.constant 0.000000e+00 : f32
    %22 = vector.broadcast %cst_14 : f32 to vector<16x16xf32>
    %23 = arith.maximumf %21, %22 : vector<16x16xf32>
    %c128 = arith.constant 128 : index
    %c0_15 = arith.constant 0 : index
    %24 = vector.load %arg3[%c128, %c0_15] : memref<144x128xbf16, #tpu.memory_space<vmem>>, vector<16x10xbf16>
    %25 = arith.truncf %23 : vector<16x16xf32> to vector<16x16xbf16>
    %cst_16 = arith.constant dense<0.000000e+00> : vector<16x10xf32>
    %26 = tpu.matmul %25, %24, %cst_16 {dimension_numbers = #tpu.dot_dimension_numbers<[1], [0], [0], [1], [0, 0, 1, 1], [], []>} : vector<16x16xbf16>, vector<16x10xbf16>, vector<16x10xf32> -> vector<16x10xf32>
    %c3 = arith.constant 3 : index
    %c0_17 = arith.constant 0 : index
    %27 = vector.load %arg4[%c3, %c0_17] : memref<4x128xf32, #tpu.memory_space<vmem>>, vector<1x10xf32>
    %28 = vector.broadcast %27 : vector<1x10xf32> to vector<16x10xf32>
    %29 = arith.addf %26, %28 : vector<16x10xf32>
    %c0_18 = arith.constant 0 : index
    %c0_19 = arith.constant 0 : index
    %30 = vector.load %arg5[%c0_18, %c0_19] : memref<16x128xf32, #tpu.memory_space<vmem>>, vector<16x16xf32>
    tpu.vector_store %arg5[%c0_18, %c0_19], %23 {strides = array<i32>} : memref<16x128xf32, #tpu.memory_space<vmem>>, vector<16x16xf32>,
    %c0_20 = arith.constant 0 : index
    %c16 = arith.constant 16 : index
    %31 = vector.load %arg5[%c0_20, %c16] : memref<16x128xf32, #tpu.memory_space<vmem>>, vector<16x10xf32>
    tpu.vector_store %arg5[%c0_20, %c16], %29 {strides = array<i32>} : memref<16x128xf32, #tpu.memory_space<vmem>>, vector<16x10xf32>,
    return
  }
  func.func @transform_0(%arg0: i32) -> (i32, i32) {
    %c0_i32 = arith.constant 0 : i32
    %c0_i32_0 = arith.constant 0 : i32
    return %arg0, %c0_i32 : i32, i32
  }
  func.func @transform_1(%arg0: i32) -> (i32, i32) {
    %c0_i32 = arith.constant 0 : i32
    %c0_i32_0 = arith.constant 0 : i32
    %c0_i32_1 = arith.constant 0 : i32
    return %c0_i32, %c0_i32_0 : i32, i32
  }
  func.func @transform_2(%arg0: i32) -> (i32, i32) {
    %c0_i32 = arith.constant 0 : i32
    %c0_i32_0 = arith.constant 0 : i32
    %c0_i32_1 = arith.constant 0 : i32
    return %c0_i32, %c0_i32_0 : i32, i32
  }
  func.func @transform_3(%arg0: i32) -> (i32, i32) {
    %c0_i32 = arith.constant 0 : i32
    %c0_i32_0 = arith.constant 0 : i32
    %c0_i32_1 = arith.constant 0 : i32
    return %c0_i32, %c0_i32_0 : i32, i32
  }
  func.func @transform_4(%arg0: i32) -> (i32, i32) {
    %c0_i32 = arith.constant 0 : i32
    %c0_i32_0 = arith.constant 0 : i32
    return %arg0, %c0_i32 : i32, i32
  }
}

</mosaic_0001>

<llo_original>
// kernel: tpu_custom_call.1
$region0: #{tpu_custom_call.1}
  #allocation0 [shape = 'u32[]', space=smem, size = 0x4, offset = 0x4, fixed_abs, tag = 'smem constant byte address 0x4 - core index']
  #allocation1 [shape = 'u32[144,128]{1,0:T(1,128)}', space=vmem, size = 0x12000, scoped, tag = 'internal scratch']
  %s0 = inlined_call_operand.hbm [shape: bf16[16,2352], index: 0, kind: input, shape index: {}]
  %s1 = inlined_call_operand.hbm [shape: bf16[50,2352], index: 1, kind: input, shape index: {}]
  %s2 = inlined_call_operand.hbm [shape: bf16[144,128], index: 2, kind: input, shape index: {}]
  %s3 = inlined_call_operand.vmem [shape: f32[4,128], index: 3, kind: input, shape index: {}]
  %s4 = inlined_call_operand.hbm [shape: f32[16,128], index: 4, kind: output, shape index: {}]
  %s5 = sld [smem:[#allocation0]]
  $region38: #{tpu_custom_call.1} parent=0
    _
  %s7 = ssub.s32 1, %s5
  %s8 = scalar_select 0, %s7, %s5
  $region1: #{tpu_custom_call.1} parent=0
    #allocation2 [shape = 'u8[77824]{0}', space=vmem, size = 0x13000, scoped, tag = 'input window, operand 0, single buffered']
    #allocation3 [shape = 's32[1]{0}', space=sflag, size = 0x4, scoped, tag = 'scoped memory for tpu_custom_call.1']
    #allocation4 [shape = 's32[1]{0}', space=sflag, size = 0x4, scoped, tag = 'scoped memory for tpu_custom_call.1']
    #allocation5 [shape = 'u8[272384]{0}', space=vmem, size = 0x42800, scoped, tag = 'input window, operand 1, single buffered']
    #allocation6 [shape = 's32[1]{0}', space=sflag, size = 0x4, scoped, tag = 'scoped memory for tpu_custom_call.1']
    #allocation7 [shape = 'u8[36864]{0}', space=vmem, size = 0x9000, scoped, tag = 'input window, operand 2, single buffered']
    #allocation8 [shape = 'u8[8192]{0}', space=vmem, size = 0x2000, scoped, tag = 'output window, operand 0, single buffered']
    %9 = vsyncpa [#allocation3], 0
    %10 = vsyncpa [#allocation6], 0
    %11 = vsyncpa [#allocation4], 0
    // Predicated region
    $region2: #{tpu_custom_call.1} parent=1 // pred_check
      _
    $region3: #{tpu_custom_call.1} parent=1 // pred_check_branch
      %13 = sbr.rel (0) target = $region5
    $region4: #{tpu_custom_call.1} parent=1 // pred_region
      %s15 = ssub.s32 2432, 2432
      %16 = vsyncadd [#allocation3], %s15
      %s17 = sshll.u32 [#allocation2], 4
      %s18 = int_to_ptr.vmem [resolvable:$true] %s17
      %23 = dma.hbm_to_vmem [thread:$0]  %s0, 2432, %s18, [#allocation3], 1216, 1216, 76
    $region5: #{tpu_custom_call.1} parent=1 // pred_fallthru
      _
    // Predicated region
    $region6: #{tpu_custom_call.1} parent=1 // pred_check
      _
    $region7: #{tpu_custom_call.1} parent=1 // pred_check_branch
      %25 = sbr.rel (0) target = $region9
    $region8: #{tpu_custom_call.1} parent=1 // pred_region
      %s27 = ssub.s32 8512, 8512
      %28 = vsyncadd [#allocation6], %s27
      %s29 = sshll.u32 [#allocation5], 4
      %s30 = int_to_ptr.vmem [resolvable:$true] %s29
      %35 = dma.hbm_to_vmem [thread:$0]  %s1, 8512, %s30, [#allocation6], 1216, 1216, 76
    $region9: #{tpu_custom_call.1} parent=1 // pred_fallthru
      _
    // Predicated region
    $region10: #{tpu_custom_call.1} parent=1 // pred_check
      _
    $region11: #{tpu_custom_call.1} parent=1 // pred_check_branch
      %37 = sbr.rel (0) target = $region13
    $region12: #{tpu_custom_call.1} parent=1 // pred_region
      %s39 = ssub.s32 1152, 1152
      %40 = vsyncadd [#allocation6], %s39
      %s41 = sshll.u32 [#allocation7], 4
      %s42 = int_to_ptr.vmem [resolvable:$true] %s41
      %47 = dma.hbm_to_vmem [thread:$0]  %s2, 1152, %s42, [#allocation6], 64, 64, 4
    $region13: #{tpu_custom_call.1} parent=1 // pred_fallthru
      _
    // Predicated region
    $region14: #{tpu_custom_call.1} parent=1 // pred_check
      _
    $region15: #{tpu_custom_call.1} parent=1 // pred_check_branch
      %49 = sbr.rel (0) target = $region17
    $region16: #{tpu_custom_call.1} parent=1 // pred_region
      _
    $region17: #{tpu_custom_call.1} parent=1 // pred_fallthru
      _
    // Predicated region
    $region18: #{tpu_custom_call.1} parent=1 // pred_check
      _
    $region19: #{tpu_custom_call.1} parent=1 // pred_check_branch
      %51 = sbr.rel (0) target = $region21
    $region20: #{tpu_custom_call.1} parent=1 // pred_region
      %52 = dma.done [#allocation3], 2432
    $region21: #{tpu_custom_call.1} parent=1 // pred_fallthru
      _
    // Predicated region
    $region22: #{tpu_custom_call.1} parent=1 // pred_check
      _
    $region23: #{tpu_custom_call.1} parent=1 // pred_check_branch
      %54 = sbr.rel (0) target = $region25
    $region24: #{tpu_custom_call.1} parent=1 // pred_region
      %55 = dma.done [#allocation6], 8512
    $region25: #{tpu_custom_call.1} parent=1 // pred_fallthru
      _
    // Predicated region
    $region26: #{tpu_custom_call.1} parent=1 // pred_check
      _
    $region27: #{tpu_custom_call.1} parent=1 // pred_check_branch
      %57 = sbr.rel (0) target = $region29
    $region28: #{tpu_custom_call.1} parent=1 // pred_region
      %58 = dma.done [#allocation6], 1152
    $region29: #{tpu_custom_call.1} parent=1 // pred_fallthru
      _
    %v60 = vld [vmem:[#allocation2] sm:$0xff]
    %v61 = vld [vmem:[#allocation2 + $0x8] sm:$0xff]
    %v62 = vld [vmem:[#allocation2 + $0x10] sm:$0xff]
    %v63 = vld [vmem:[#allocation2 + $0x18] sm:$0xff]
    %v64 = vld [vmem:[#allocation2 + $0x20] sm:$0xff]
    %v65 = vld [vmem:[#allocation2 + $0x28] sm:$0xff]
    %v66 = vld [vmem:[#allocation2 + $0x30] sm:$0xff]
    %v67 = vld [vmem:[#allocation2 + $0x38] sm:$0xff]
    %v68 = vld [vmem:[#allocation2 + $0x40] sm:$0xff]
    %v69 = vld [vmem:[#allocation2 + $0x48] sm:$0xf]
    %v70 = vld [vmem:[#allocation2 + $0x4c] sm:$0xff]
    %v71 = vld [vmem:[#allocation2 + $0x54] sm:$0xff]
    %v72 = vld [vmem:[#allocation2 + $0x5c] sm:$0xff]
    %v73 = vld [vmem:[#allocation2 + $0x64] sm:$0xff]
    %v74 = vld [vmem:[#allocation2 + $0x6c] sm:$0xff]
    %v75 = vld [vmem:[#allocation2 + $0x74] sm:$0xff]
    %v76 = vld [vmem:[#allocation2 + $0x7c] sm:$0xff]
    %v77 = vld [vmem:[#allocation2 + $0x84] sm:$0xff]
    %v78 = vld [vmem:[#allocation2 + $0x8c] sm:$0xff]
    %v79 = vld [vmem:[#allocation2 + $0x94] sm:$0xf]
    %v80 = vld [vmem:[#allocation5] sm:$0xff]
    %v81 = vld [vmem:[#allocation5 + $0x8] sm:$0xff]
    %v82 = vld [vmem:[#allocation5 + $0x10] sm:$0xff]
    %v83 = vld [vmem:[#allocation5 + $0x18] sm:$0xff]
    %v84 = vld [vmem:[#allocation5 + $0x20] sm:$0xff]
    %v85 = vld [vmem:[#allocation5 + $0x28] sm:$0xff]
    %v86 = vld [vmem:[#allocation5 + $0x30] sm:$0xff]
    %v87 = vld [vmem:[#allocation5 + $0x38] sm:$0xff]
    %v88 = vld [vmem:[#allocation5 + $0x40] sm:$0xff]
    %v89 = vld [vmem:[#allocation5 + $0x48] sm:$0xf]
    %v90 = vld [vmem:[#allocation5 + $0x4c] sm:$0xff]
    %v91 = vld [vmem:[#allocation5 + $0x54] sm:$0xff]
    %v92 = vld [vmem:[#allocation5 + $0x5c] sm:$0xff]
    %v93 = vld [vmem:[#allocation5 + $0x64] sm:$0xff]
    %v94 = vld [vmem:[#allocation5 + $0x6c] sm:$0xff]
    %v95 = vld [vmem:[#allocation5 + $0x74] sm:$0xff]
    %v96 = vld [vmem:[#allocation5 + $0x7c] sm:$0xff]
    %v97 = vld [vmem:[#allocation5 + $0x84] sm:$0xff]
    %v98 = vld [vmem:[#allocation5 + $0x8c] sm:$0xff]
    %v99 = vld [vmem:[#allocation5 + $0x94] sm:$0xf]
    %v100 = vld [vmem:[#allocation5 + $0x98] sm:$0xff]
    %v101 = vld [vmem:[#allocation5 + $0xa0] sm:$0xff]
    %v102 = vld [vmem:[#allocation5 + $0xa8] sm:$0xff]
    %v103 = vld [vmem:[#allocation5 + $0xb0] sm:$0xff]
    %v104 = vld [vmem:[#allocation5 + $0xb8] sm:$0xff]
    %v105 = vld [vmem:[#allocation5 + $0xc0] sm:$0xff]
    %v106 = vld [vmem:[#allocation5 + $0xc8] sm:$0xff]
    %v107 = vld [vmem:[#allocation5 + $0xd0] sm:$0xff]
    %v108 = vld [vmem:[#allocation5 + $0xd8] sm:$0xff]
    %v109 = vld [vmem:[#allocation5 + $0xe0] sm:$0xf]
    %v110 = vld [vmem:[#allocation5 + $0xe4] sm:$0xff]
    %v111 = vld [vmem:[#allocation5 + $0xec] sm:$0xff]
    %v112 = vld [vmem:[#allocation5 + $0xf4] sm:$0xff]
    %v113 = vld [vmem:[#allocation5 + $0xfc] sm:$0xff]
    %v114 = vld [vmem:[#allocation5 + $0x104] sm:$0xff]
    %v115 = vld [vmem:[#allocation5 + $0x10c] sm:$0xff]
    %v116 = vld [vmem:[#allocation5 + $0x114] sm:$0xff]
    %v117 = vld [vmem:[#allocation5 + $0x11c] sm:$0xff]
    %v118 = vld [vmem:[#allocation5 + $0x124] sm:$0xff]
    %v119 = vld [vmem:[#allocation5 + $0x12c] sm:$0xf]
    %v120 = vld [vmem:[#allocation5 + $0x130] sm:$0xff]
    %v121 = vld [vmem:[#allocation5 + $0x138] sm:$0xff]
    %v122 = vld [vmem:[#allocation5 + $0x140] sm:$0xff]
    %v123 = vld [vmem:[#allocation5 + $0x148] sm:$0xff]
    %v124 = vld [vmem:[#allocation5 + $0x150] sm:$0xff]
    %v125 = vld [vmem:[#allocation5 + $0x158] sm:$0xff]
    %v126 = vld [vmem:[#allocation5 + $0x160] sm:$0xff]
    %v127 = vld [vmem:[#allocation5 + $0x168] sm:$0xff]
    %v128 = vld [vmem:[#allocation5 + $0x170] sm:$0xff]
    %v129 = vld [vmem:[#allocation5 + $0x178] sm:$0xf]
    %v130 = vld [vmem:[#allocation5 + $0x17c] sm:$0xff]
    %v131 = vld [vmem:[#allocation5 + $0x184] sm:$0xff]
    %v132 = vld [vmem:[#allocation5 + $0x18c] sm:$0xff]
    %v133 = vld [vmem:[#allocation5 + $0x194] sm:$0xff]
    %v134 = vld [vmem:[#allocation5 + $0x19c] sm:$0xff]
    %v135 = vld [vmem:[#allocation5 + $0x1a4] sm:$0xff]
    %v136 = vld [vmem:[#allocation5 + $0x1ac] sm:$0xff]
    %v137 = vld [vmem:[#allocation5 + $0x1b4] sm:$0xff]
    %v138 = vld [vmem:[#allocation5 + $0x1bc] sm:$0xff]
    %v139 = vld [vmem:[#allocation5 + $0x1c4] sm:$0xf]
    %v140 = vld [vmem:[#allocation5 + $0x1c8] sm:$0x11]
    %v141 = vld [vmem:[#allocation5 + $0x1d0] sm:$0x11]
    %v142 = vld [vmem:[#allocation5 + $0x1d8] sm:$0x11]
    %v143 = vld [vmem:[#allocation5 + $0x1e0] sm:$0x11]
    %v144 = vld [vmem:[#allocation5 + $0x1e8] sm:$0x11]
    %v145 = vld [vmem:[#allocation5 + $0x1f0] sm:$0x11]
    %v146 = vld [vmem:[#allocation5 + $0x1f8] sm:$0x11]
    %v147 = vld [vmem:[#allocation5 + $0x200] sm:$0x11]
    %v148 = vld [vmem:[#allocation5 + $0x208] sm:$0x11]
    %v149 = vld [vmem:[#allocation5 + $0x210] sm:$0x1]
    %v150 = vld [vmem:[%s3] sm:$0x1]
    %v151 = vlaneseq
    %v152 = vshrl.u32 %v151, 7
    %v153 = vsub.s32 0, %v152
    %v154 = vrot.slane %v150, %v153
    %v175 = vunpack.c.l.b16 %v60
    %v176 = vunpack.c.h.b16 %v60
    %v177 = vunpack.c.l.b16 %v61
    %v178 = vunpack.c.h.b16 %v61
    %v179 = vunpack.c.l.b16 %v62
    %v180 = vunpack.c.h.b16 %v62
    %v181 = vunpack.c.l.b16 %v63
    %v182 = vunpack.c.h.b16 %v63
    %v183 = vunpack.c.l.b16 %v64
    %v184 = vunpack.c.h.b16 %v64
    %v185 = vunpack.c.l.b16 %v65
    %v186 = vunpack.c.h.b16 %v65
    %v187 = vunpack.c.l.b16 %v66
    %v188 = vunpack.c.h.b16 %v66
    %v189 = vunpack.c.l.b16 %v67
    %v190 = vunpack.c.h.b16 %v67
    %v191 = vunpack.c.l.b16 %v68
    %v192 = vunpack.c.h.b16 %v68
    %v193 = vunpack.c.l.b16 %v69
    %v194 = vunpack.c.l.b16 %v70
    %v195 = vunpack.c.h.b16 %v70
    %v196 = vunpack.c.l.b16 %v71
    %v197 = vunpack.c.h.b16 %v71
    %v198 = vunpack.c.l.b16 %v72
    %v199 = vunpack.c.h.b16 %v72
    %v200 = vunpack.c.l.b16 %v73
    %v201 = vunpack.c.h.b16 %v73
    %v202 = vunpack.c.l.b16 %v74
    %v203 = vunpack.c.h.b16 %v74
    %v204 = vunpack.c.l.b16 %v75
    %v205 = vunpack.c.h.b16 %v75
    %v206 = vunpack.c.l.b16 %v76
    %v207 = vunpack.c.h.b16 %v76
    %v208 = vunpack.c.l.b16 %v77
    %v209 = vunpack.c.h.b16 %v77
    %v210 = vunpack.c.l.b16 %v78
    %v211 = vunpack.c.h.b16 %v78
    %v212 = vunpack.c.l.b16 %v79
    %v213 = vpack.c.b16 %v194, %v175
    %v214 = vpack.c.b16 %v195, %v176
    %v215 = vpack.c.b16 %v196, %v177
    %v216 = vpack.c.b16 %v197, %v178
    %v217 = vpack.c.b16 %v198, %v179
    %v218 = vpack.c.b16 %v199, %v180
    %v219 = vpack.c.b16 %v200, %v181
    %v220 = vpack.c.b16 %v201, %v182
    %v221 = vpack.c.b16 %v202, %v183
    %v222 = vpack.c.b16 %v203, %v184
    %v223 = vpack.c.b16 %v204, %v185
    %v224 = vpack.c.b16 %v205, %v186
    %v225 = vpack.c.b16 %v206, %v187
    %v226 = vpack.c.b16 %v207, %v188
    %v227 = vpack.c.b16 %v208, %v189
    %v228 = vpack.c.b16 %v209, %v190
    %v229 = vpack.c.b16 %v210, %v191
    %v230 = vpack.c.b16 %v211, %v192
    %v231 = vpack.c.b16 %v212, %v193
    %v320 = vunpack.c.l.b16 %v80
    %v321 = vunpack.c.h.b16 %v80
    %v322 = vunpack.c.l.b16 %v81
    %v323 = vunpack.c.h.b16 %v81
    %v324 = vunpack.c.l.b16 %v82
    %v325 = vunpack.c.h.b16 %v82
    %v326 = vunpack.c.l.b16 %v83
    %v327 = vunpack.c.h.b16 %v83
    %v328 = vunpack.c.l.b16 %v84
    %v329 = vunpack.c.h.b16 %v84
    %v330 = vunpack.c.l.b16 %v85
    %v331 = vunpack.c.h.b16 %v85
    %v332 = vunpack.c.l.b16 %v86
    %v333 = vunpack.c.h.b16 %v86
    %v334 = vunpack.c.l.b16 %v87
    %v335 = vunpack.c.h.b16 %v87
    %v336 = vunpack.c.l.b16 %v88
    %v337 = vunpack.c.h.b16 %v88
    %v338 = vunpack.c.l.b16 %v89
    %v339 = vunpack.c.l.b16 %v90
    %v340 = vunpack.c.h.b16 %v90
    %v341 = vunpack.c.l.b16 %v91
    %v342 = vunpack.c.h.b16 %v91
    %v343 = vunpack.c.l.b16 %v92
    %v344 = vunpack.c.h.b16 %v92
    %v345 = vunpack.c.l.b16 %v93
    %v346 = vunpack.c.h.b16 %v93
    %v347 = vunpack.c.l.b16 %v94
    %v348 = vunpack.c.h.b16 %v94
    %v349 = vunpack.c.l.b16 %v95
    %v350 = vunpack.c.h.b16 %v95
    %v351 = vunpack.c.l.b16 %v96
    %v352 = vunpack.c.h.b16 %v96
    %v353 = vunpack.c.l.b16 %v97
    %v354 = vunpack.c.h.b16 %v97
    %v355 = vunpack.c.l.b16 %v98
    %v356 = vunpack.c.h.b16 %v98
    %v357 = vunpack.c.l.b16 %v99
    %v358 = vunpack.c.l.b16 %v100
    %v359 = vunpack.c.h.b16 %v100
    %v360 = vunpack.c.l.b16 %v101
    %v361 = vunpack.c.h.b16 %v101
    %v362 = vunpack.c.l.b16 %v102
    %v363 = vunpack.c.h.b16 %v102
    %v364 = vunpack.c.l.b16 %v103
    %v365 = vunpack.c.h.b16 %v103
    %v366 = vunpack.c.l.b16 %v104
    %v367 = vunpack.c.h.b16 %v104
    %v368 = vunpack.c.l.b16 %v105
    %v369 = vunpack.c.h.b16 %v105
    %v370 = vunpack.c.l.b16 %v106
    %v371 = vunpack.c.h.b16 %v106
    %v372 = vunpack.c.l.b16 %v107
    %v373 = vunpack.c.h.b16 %v107
    %v374 = vunpack.c.l.b16 %v108
    %v375 = vunpack.c.h.b16 %v108
    %v376 = vunpack.c.l.b16 %v109
    %v377 = vunpack.c.l.b16 %v110
    %v378 = vunpack.c.h.b16 %v110
    %v379 = vunpack.c.l.b16 %v111
    %v380 = vunpack.c.h.b16 %v111
    %v381 = vunpack.c.l.b16 %v112
    %v382 = vunpack.c.h.b16 %v112
    %v383 = vunpack.c.l.b16 %v113
    %v384 = vunpack.c.h.b16 %v113
    %v385 = vunpack.c.l.b16 %v114
    %v386 = vunpack.c.h.b16 %v114
    %v387 = vunpack.c.l.b16 %v115
    %v388 = vunpack.c.h.b16 %v115
    %v389 = vunpack.c.l.b16 %v116
    %v390 = vunpack.c.h.b16 %v116
    %v391 = vunpack.c.l.b16 %v117
    %v392 = vunpack.c.h.b16 %v117
    %v393 = vunpack.c.l.b16 %v118
    %v394 = vunpack.c.h.b16 %v118
    %v395 = vunpack.c.l.b16 %v119
    %v396 = vunpack.c.l.b16 %v120
    %v397 = vunpack.c.h.b16 %v120
    %v398 = vunpack.c.l.b16 %v121
    %v399 = vunpack.c.h.b16 %v121
    %v400 = vunpack.c.l.b16 %v122
    %v401 = vunpack.c.h.b16 %v122
    %v402 = vunpack.c.l.b16 %v123
    %v403 = vunpack.c.h.b16 %v123
    %v404 = vunpack.c.l.b16 %v124
    %v405 = vunpack.c.h.b16 %v124
    %v406 = vunpack.c.l.b16 %v125
    %v407 = vunpack.c.h.b16 %v125
    %v408 = vunpack.c.l.b16 %v126
    %v409 = vunpack.c.h.b16 %v126
    %v410 = vunpack.c.l.b16 %v127
    %v411 = vunpack.c.h.b16 %v127
    %v412 = vunpack.c.l.b16 %v128
    %v413 = vunpack.c.h.b16 %v128
    %v414 = vunpack.c.l.b16 %v129
    %v415 = vunpack.c.l.b16 %v130
    %v416 = vunpack.c.h.b16 %v130
    %v417 = vunpack.c.l.b16 %v131
    %v418 = vunpack.c.h.b16 %v131
    %v419 = vunpack.c.l.b16 %v132
    %v420 = vunpack.c.h.b16 %v132
    %v421 = vunpack.c.l.b16 %v133
    %v422 = vunpack.c.h.b16 %v133
    %v423 = vunpack.c.l.b16 %v134
    %v424 = vunpack.c.h.b16 %v134
    %v425 = vunpack.c.l.b16 %v135
    %v426 = vunpack.c.h.b16 %v135
    %v427 = vunpack.c.l.b16 %v136
    %v428 = vunpack.c.h.b16 %v136
    %v429 = vunpack.c.l.b16 %v137
    %v430 = vunpack.c.h.b16 %v137
    %v431 = vunpack.c.l.b16 %v138
    %v432 = vunpack.c.h.b16 %v138
    %v433 = vunpack.c.l.b16 %v139
    %v434 = vunpack.c.l.b16 %v140
    %v435 = vunpack.c.h.b16 %v140
    %v436 = vunpack.c.l.b16 %v141
    %v437 = vunpack.c.h.b16 %v141
    %v438 = vunpack.c.l.b16 %v142
    %v439 = vunpack.c.h.b16 %v142
    %v440 = vunpack.c.l.b16 %v143
    %v441 = vunpack.c.h.b16 %v143
    %v442 = vunpack.c.l.b16 %v144
    %v443 = vunpack.c.h.b16 %v144
    %v444 = vunpack.c.l.b16 %v145
    %v445 = vunpack.c.h.b16 %v145
    %v446 = vunpack.c.l.b16 %v146
    %v447 = vunpack.c.h.b16 %v146
    %v448 = vunpack.c.l.b16 %v147
    %v449 = vunpack.c.h.b16 %v147
    %v450 = vunpack.c.l.b16 %v148
    %v451 = vunpack.c.h.b16 %v148
    %v452 = vunpack.c.l.b16 %v149
    %v453 = vpack.c.b16 %v339, %v320
    %v454 = vpack.c.b16 %v340, %v321
    %v455 = vpack.c.b16 %v341, %v322
    %v456 = vpack.c.b16 %v342, %v323
    %v457 = vpack.c.b16 %v343, %v324
    %v458 = vpack.c.b16 %v344, %v325
    %v459 = vpack.c.b16 %v345, %v326
    %v460 = vpack.c.b16 %v346, %v327
    %v461 = vpack.c.b16 %v347, %v328
    %v462 = vpack.c.b16 %v348, %v329
    %v463 = vpack.c.b16 %v349, %v330
    %v464 = vpack.c.b16 %v350, %v331
    %v465 = vpack.c.b16 %v351, %v332
    %v466 = vpack.c.b16 %v352, %v333
    %v467 = vpack.c.b16 %v353, %v334
    %v468 = vpack.c.b16 %v354, %v335
    %v469 = vpack.c.b16 %v355, %v336
    %v470 = vpack.c.b16 %v356, %v337
    %v471 = vpack.c.b16 %v357, %v338
    %v472 = vpack.c.b16 %v377, %v358
    %v473 = vpack.c.b16 %v378, %v359
    %v474 = vpack.c.b16 %v379, %v360
    %v475 = vpack.c.b16 %v380, %v361
    %v476 = vpack.c.b16 %v381, %v362
    %v477 = vpack.c.b16 %v382, %v363
    %v478 = vpack.c.b16 %v383, %v364
    %v479 = vpack.c.b16 %v384, %v365
    %v480 = vpack.c.b16 %v385, %v366
    %v481 = vpack.c.b16 %v386, %v367
    %v482 = vpack.c.b16 %v387, %v368
    %v483 = vpack.c.b16 %v388, %v369
    %v484 = vpack.c.b16 %v389, %v370
    %v485 = vpack.c.b16 %v390, %v371
    %v486 = vpack.c.b16 %v391, %v372
    %v487 = vpack.c.b16 %v392, %v373
    %v488 = vpack.c.b16 %v393, %v374
    %v489 = vpack.c.b16 %v394, %v375
    %v490 = vpack.c.b16 %v395, %v376
    %v491 = vpack.c.b16 %v415, %v396
    %v492 = vpack.c.b16 %v416, %v397
    %v493 = vpack.c.b16 %v417, %v398
    %v494 = vpack.c.b16 %v418, %v399
    %v495 = vpack.c.b16 %v419, %v400
    %v496 = vpack.c.b16 %v420, %v401
    %v497 = vpack.c.b16 %v421, %v402
    %v498 = vpack.c.b16 %v422, %v403
    %v499 = vpack.c.b16 %v423, %v404
    %v500 = vpack.c.b16 %v424, %v405
    %v501 = vpack.c.b16 %v425, %v406
    %v502 = vpack.c.b16 %v426, %v407
    %v503 = vpack.c.b16 %v427, %v408
    %v504 = vpack.c.b16 %v428, %v409
    %v505 = vpack.c.b16 %v429, %v410
    %v506 = vpack.c.b16 %v430, %v411
    %v507 = vpack.c.b16 %v431, %v412
    %v508 = vpack.c.b16 %v432, %v413
    %v509 = vpack.c.b16 %v433, %v414
    %v510 = vpack.c.b16 %v434, %v434
    %v511 = vpack.c.b16 %v435, %v435
    %v512 = vpack.c.b16 %v436, %v436
    %v513 = vpack.c.b16 %v437, %v437
    %v514 = vpack.c.b16 %v438, %v438
    %v515 = vpack.c.b16 %v439, %v439
    %v516 = vpack.c.b16 %v440, %v440
    %v517 = vpack.c.b16 %v441, %v441
    %v518 = vpack.c.b16 %v442, %v442
    %v519 = vpack.c.b16 %v443, %v443
    %v520 = vpack.c.b16 %v444, %v444
    %v521 = vpack.c.b16 %v445, %v445
    %v522 = vpack.c.b16 %v446, %v446
    %v523 = vpack.c.b16 %v447, %v447
    %v524 = vpack.c.b16 %v448, %v448
    %v525 = vpack.c.b16 %v449, %v449
    %v526 = vpack.c.b16 %v450, %v450
    %v527 = vpack.c.b16 %v451, %v451
    %v528 = vpack.c.b16 %v452, %v452
    %vm601 = vcmask 392192
    %v603 = vsel %vm601, %v231, 0
    %v606 = vsel %vm601, %v471, 0
    %v609 = vsel %vm601, %v490, 0
    %v612 = vsel %vm601, %v509, 0
    %v615 = vsel %vm601, %v528, 0
    %617 = vmatprep.subr.bf16.mxu0 0
    %618 = vmatpush1.bf16.xpose.msra.mxu0 0
    %619 = vmatprep.subr.bf16.mxu0 0
    %620 = vmatpush1.bf16.xpose.msra.mxu0 0
    %621 = vmatprep.subr.bf16.mxu0 0
    %622 = vmatpush1.bf16.xpose.msra.mxu0 0
    %623 = vmatprep.subr.bf16.mxu0 0
    %624 = vmatpush1.bf16.xpose.msra.mxu0 0
    %625 = vmatprep.subr.bf16.mxu0 %v511
    %626 = vmatpush1.bf16.xpose.msra.mxu0 %v510
    %627 = vmatprep.subr.bf16.mxu0 %v492
    %628 = vmatpush1.bf16.xpose.msra.mxu0 %v491
    %629 = vmatprep.subr.bf16.mxu0 %v473
    %630 = vmatpush1.bf16.xpose.msra.mxu0 %v472
    %631 = vmatprep.subr.bf16.mxu0 %v454
    %632 = vmatpush1.bf16.xpose.msra.mxu0 %v453
    %633 = vmatprep.subr.bf16.mxu0 0
    %634 = vmatpush2.bf16.xpose.msra.mxu0 0
    %635 = vmatprep.subr.bf16.mxu0 0
    %636 = vmatpush2.bf16.xpose.msra.mxu0 0
    %637 = vmatprep.subr.bf16.mxu0 0
    %638 = vmatpush2.bf16.xpose.msra.mxu0 0
    %639 = vmatprep.subr.bf16.mxu0 0
    %640 = vmatpush2.bf16.xpose.msra.mxu0 0
    %641 = vmatprep.subr.bf16.mxu0 0
    %642 = vmatpush2.bf16.xpose.msra.mxu0 0
    %643 = vmatprep.subr.bf16.mxu0 0
    %644 = vmatpush2.bf16.xpose.msra.mxu0 0
    %645 = vmatprep.subr.bf16.mxu0 0
    %646 = vmatpush2.bf16.xpose.msra.mxu0 0
    %647 = vmatprep.subr.bf16.mxu0 0
    %648 = vmatpush2.bf16.xpose.msra.mxu0 0
    %649 = vmatprep.mubr.bf16.mxu0 %v214
    %650 = vmatmul.mubr.bf16.gmra.mxu0 %v213
    %v651 = vpop.f32.mrf.mxu0
    %v652 = vadd.f32 %v154, %v651
    %v653 = vpop.f32.mrf.mxu0
    %v654 = vpop.f32.mrf.mxu0
    %v655 = vadd.f32 %v154, %v654
    %v656 = vpop.f32.mrf.mxu0
    %657 = vdwg.mxu0
    %658 = vmatprep.subr.bf16.mxu0 0
    %659 = vmatpush1.bf16.xpose.msra.mxu0 0
    %660 = vmatprep.subr.bf16.mxu0 0
    %661 = vmatpush1.bf16.xpose.msra.mxu0 0
    %662 = vmatprep.subr.bf16.mxu0 0
    %663 = vmatpush1.bf16.xpose.msra.mxu0 0
    %664 = vmatprep.subr.bf16.mxu0 0
    %665 = vmatpush1.bf16.xpose.msra.mxu0 0
    %666 = vmatprep.subr.bf16.mxu0 %v513
    %667 = vmatpush1.bf16.xpose.msra.mxu0 %v512
    %668 = vmatprep.subr.bf16.mxu0 %v494
    %669 = vmatpush1.bf16.xpose.msra.mxu0 %v493
    %670 = vmatprep.subr.bf16.mxu0 %v475
    %671 = vmatpush1.bf16.xpose.msra.mxu0 %v474
    %672 = vmatprep.subr.bf16.mxu0 %v456
    %673 = vmatpush1.bf16.xpose.msra.mxu0 %v455
    %674 = vmatprep.subr.bf16.mxu0 0
    %675 = vmatpush2.bf16.xpose.msra.mxu0 0
    %676 = vmatprep.subr.bf16.mxu0 0
    %677 = vmatpush2.bf16.xpose.msra.mxu0 0
    %678 = vmatprep.subr.bf16.mxu0 0
    %679 = vmatpush2.bf16.xpose.msra.mxu0 0
    %680 = vmatprep.subr.bf16.mxu0 0
    %681 = vmatpush2.bf16.xpose.msra.mxu0 0
    %682 = vmatprep.subr.bf16.mxu0 0
    %683 = vmatpush2.bf16.xpose.msra.mxu0 0
    %684 = vmatprep.subr.bf16.mxu0 0
    %685 = vmatpush2.bf16.xpose.msra.mxu0 0
    %686 = vmatprep.subr.bf16.mxu0 0
    %687 = vmatpush2.bf16.xpose.msra.mxu0 0
    %688 = vmatprep.subr.bf16.mxu0 0
    %689 = vmatpush2.bf16.xpose.msra.mxu0 0
    %690 = vmatprep.mubr.bf16.mxu0 %v216
    %691 = vmatmul.mubr.bf16.gmra.mxu0 %v215
    %v692 = vpop.f32.mrf.mxu0
    %v693 = vadd.f32 %v652, %v692
    %v694 = vpop.f32.mrf.mxu0
    %v695 = vpop.f32.mrf.mxu0
    %v696 = vadd.f32 %v655, %v695
    %v697 = vpop.f32.mrf.mxu0
    %698 = vdwg.mxu0
    %699 = vmatprep.subr.bf16.mxu0 0
    %700 = vmatpush1.bf16.xpose.msra.mxu0 0
    %701 = vmatprep.subr.bf16.mxu0 0
    %702 = vmatpush1.bf16.xpose.msra.mxu0 0
    %703 = vmatprep.subr.bf16.mxu0 0
    %704 = vmatpush1.bf16.xpose.msra.mxu0 0
    %705 = vmatprep.subr.bf16.mxu0 0
    %706 = vmatpush1.bf16.xpose.msra.mxu0 0
    %707 = vmatprep.subr.bf16.mxu0 %v515
    %708 = vmatpush1.bf16.xpose.msra.mxu0 %v514
    %709 = vmatprep.subr.bf16.mxu0 %v496
    %710 = vmatpush1.bf16.xpose.msra.mxu0 %v495
    %711 = vmatprep.subr.bf16.mxu0 %v477
    %712 = vmatpush1.bf16.xpose.msra.mxu0 %v476
    %713 = vmatprep.subr.bf16.mxu0 %v458
    %714 = vmatpush1.bf16.xpose.msra.mxu0 %v457
    %715 = vmatprep.subr.bf16.mxu0 0
    %716 = vmatpush2.bf16.xpose.msra.mxu0 0
    %717 = vmatprep.subr.bf16.mxu0 0
    %718 = vmatpush2.bf16.xpose.msra.mxu0 0
    %719 = vmatprep.subr.bf16.mxu0 0
    %720 = vmatpush2.bf16.xpose.msra.mxu0 0
    %721 = vmatprep.subr.bf16.mxu0 0
    %722 = vmatpush2.bf16.xpose.msra.mxu0 0
    %723 = vmatprep.subr.bf16.mxu0 0
    %724 = vmatpush2.bf16.xpose.msra.mxu0 0
    %725 = vmatprep.subr.bf16.mxu0 0
    %726 = vmatpush2.bf16.xpose.msra.mxu0 0
    %727 = vmatprep.subr.bf16.mxu0 0
    %728 = vmatpush2.bf16.xpose.msra.mxu0 0
    %729 = vmatprep.subr.bf16.mxu0 0
    %730 = vmatpush2.bf16.xpose.msra.mxu0 0
    %731 = vmatprep.mubr.bf16.mxu0 %v218
    %732 = vmatmul.mubr.bf16.gmra.mxu0 %v217
    %v733 = vpop.f32.mrf.mxu0
    %v734 = vadd.f32 %v693, %v733
    %v735 = vpop.f32.mrf.mxu0
    %v736 = vpop.f32.mrf.mxu0
    %v737 = vadd.f32 %v696, %v736
    %v738 = vpop.f32.mrf.mxu0
    %739 = vdwg.mxu0
    %740 = vmatprep.subr.bf16.mxu0 0
    %741 = vmatpush1.bf16.xpose.msra.mxu0 0
    %742 = vmatprep.subr.bf16.mxu0 0
    %743 = vmatpush1.bf16.xpose.msra.mxu0 0
    %744 = vmatprep.subr.bf16.mxu0 0
    %745 = vmatpush1.bf16.xpose.msra.mxu0 0
    %746 = vmatprep.subr.bf16.mxu0 0
    %747 = vmatpush1.bf16.xpose.msra.mxu0 0
    %748 = vmatprep.subr.bf16.mxu0 %v517
    %749 = vmatpush1.bf16.xpose.msra.mxu0 %v516
    %750 = vmatprep.subr.bf16.mxu0 %v498
    %751 = vmatpush1.bf16.xpose.msra.mxu0 %v497
    %752 = vmatprep.subr.bf16.mxu0 %v479
    %753 = vmatpush1.bf16.xpose.msra.mxu0 %v478
    %754 = vmatprep.subr.bf16.mxu0 %v460
    %755 = vmatpush1.bf16.xpose.msra.mxu0 %v459
    %756 = vmatprep.subr.bf16.mxu0 0
    %757 = vmatpush2.bf16.xpose.msra.mxu0 0
    %758 = vmatprep.subr.bf16.mxu0 0
    %759 = vmatpush2.bf16.xpose.msra.mxu0 0
    %760 = vmatprep.subr.bf16.mxu0 0
    %761 = vmatpush2.bf16.xpose.msra.mxu0 0
    %762 = vmatprep.subr.bf16.mxu0 0
    %763 = vmatpush2.bf16.xpose.msra.mxu0 0
    %764 = vmatprep.subr.bf16.mxu0 0
    %765 = vmatpush2.bf16.xpose.msra.mxu0 0
    %766 = vmatprep.subr.bf16.mxu0 0
    %767 = vmatpush2.bf16.xpose.msra.mxu0 0
    %768 = vmatprep.subr.bf16.mxu0 0
    %769 = vmatpush2.bf16.xpose.msra.mxu0 0
    %770 = vmatprep.subr.bf16.mxu0 0
    %771 = vmatpush2.bf16.xpose.msra.mxu0 0
    %772 = vmatprep.mubr.bf16.mxu0 %v220
    %773 = vmatmul.mubr.bf16.gmra.mxu0 %v219
    %v774 = vpop.f32.mrf.mxu0
    %v775 = vadd.f32 %v734, %v774
    %v776 = vpop.f32.mrf.mxu0
    %v777 = vpop.f32.mrf.mxu0
    %v778 = vadd.f32 %v737, %v777
    %v779 = vpop.f32.mrf.mxu0
    %780 = vdwg.mxu0
    %781 = vmatprep.subr.bf16.mxu0 0
    %782 = vmatpush1.bf16.xpose.msra.mxu0 0
    %783 = vmatprep.subr.bf16.mxu0 0
    %784 = vmatpush1.bf16.xpose.msra.mxu0 0
    %785 = vmatprep.subr.bf16.mxu0 0
    %786 = vmatpush1.bf16.xpose.msra.mxu0 0
    %787 = vmatprep.subr.bf16.mxu0 0
    %788 = vmatpush1.bf16.xpose.msra.mxu0 0
    %789 = vmatprep.subr.bf16.mxu0 %v519
    %790 = vmatpush1.bf16.xpose.msra.mxu0 %v518
    %791 = vmatprep.subr.bf16.mxu0 %v500
    %792 = vmatpush1.bf16.xpose.msra.mxu0 %v499
    %793 = vmatprep.subr.bf16.mxu0 %v481
    %794 = vmatpush1.bf16.xpose.msra.mxu0 %v480
    %795 = vmatprep.subr.bf16.mxu0 %v462
    %796 = vmatpush1.bf16.xpose.msra.mxu0 %v461
    %797 = vmatprep.subr.bf16.mxu0 0
    %798 = vmatpush2.bf16.xpose.msra.mxu0 0
    %799 = vmatprep.subr.bf16.mxu0 0
    %800 = vmatpush2.bf16.xpose.msra.mxu0 0
    %801 = vmatprep.subr.bf16.mxu0 0
    %802 = vmatpush2.bf16.xpose.msra.mxu0 0
    %803 = vmatprep.subr.bf16.mxu0 0
    %804 = vmatpush2.bf16.xpose.msra.mxu0 0
    %805 = vmatprep.subr.bf16.mxu0 0
    %806 = vmatpush2.bf16.xpose.msra.mxu0 0
    %807 = vmatprep.subr.bf16.mxu0 0
    %808 = vmatpush2.bf16.xpose.msra.mxu0 0
    %809 = vmatprep.subr.bf16.mxu0 0
    %810 = vmatpush2.bf16.xpose.msra.mxu0 0
    %811 = vmatprep.subr.bf16.mxu0 0
    %812 = vmatpush2.bf16.xpose.msra.mxu0 0
    %813 = vmatprep.mubr.bf16.mxu0 %v222
    %814 = vmatmul.mubr.bf16.gmra.mxu0 %v221
    %v815 = vpop.f32.mrf.mxu0
    %v816 = vadd.f32 %v775, %v815
    %v817 = vpop.f32.mrf.mxu0
    %v818 = vpop.f32.mrf.mxu0
    %v819 = vadd.f32 %v778, %v818
    %v820 = vpop.f32.mrf.mxu0
    %821 = vdwg.mxu0
    %822 = vmatprep.subr.bf16.mxu0 0
    %823 = vmatpush1.bf16.xpose.msra.mxu0 0
    %824 = vmatprep.subr.bf16.mxu0 0
    %825 = vmatpush1.bf16.xpose.msra.mxu0 0
    %826 = vmatprep.subr.bf16.mxu0 0
    %827 = vmatpush1.bf16.xpose.msra.mxu0 0
    %828 = vmatprep.subr.bf16.mxu0 0
    %829 = vmatpush1.bf16.xpose.msra.mxu0 0
    %830 = vmatprep.subr.bf16.mxu0 %v521
    %831 = vmatpush1.bf16.xpose.msra.mxu0 %v520
    %832 = vmatprep.subr.bf16.mxu0 %v502
    %833 = vmatpush1.bf16.xpose.msra.mxu0 %v501
    %834 = vmatprep.subr.bf16.mxu0 %v483
    %835 = vmatpush1.bf16.xpose.msra.mxu0 %v482
    %836 = vmatprep.subr.bf16.mxu0 %v464
    %837 = vmatpush1.bf16.xpose.msra.mxu0 %v463
    %838 = vmatprep.subr.bf16.mxu0 0
    %839 = vmatpush2.bf16.xpose.msra.mxu0 0
    %840 = vmatprep.subr.bf16.mxu0 0
    %841 = vmatpush2.bf16.xpose.msra.mxu0 0
    %842 = vmatprep.subr.bf16.mxu0 0
    %843 = vmatpush2.bf16.xpose.msra.mxu0 0
    %844 = vmatprep.subr.bf16.mxu0 0
    %845 = vmatpush2.bf16.xpose.msra.mxu0 0
    %846 = vmatprep.subr.bf16.mxu0 0
    %847 = vmatpush2.bf16.xpose.msra.mxu0 0
    %848 = vmatprep.subr.bf16.mxu0 0
    %849 = vmatpush2.bf16.xpose.msra.mxu0 0
    %850 = vmatprep.subr.bf16.mxu0 0
    %851 = vmatpush2.bf16.xpose.msra.mxu0 0
    %852 = vmatprep.subr.bf16.mxu0 0
    %853 = vmatpush2.bf16.xpose.msra.mxu0 0
    %854 = vmatprep.mubr.bf16.mxu0 %v224
    %855 = vmatmul.mubr.bf16.gmra.mxu0 %v223
    %v856 = vpop.f32.mrf.mxu0
    %v857 = vadd.f32 %v816, %v856
    %v858 = vpop.f32.mrf.mxu0
    %v859 = vpop.f32.mrf.mxu0
    %v860 = vadd.f32 %v819, %v859
    %v861 = vpop.f32.mrf.mxu0
    %862 = vdwg.mxu0
    %863 = vmatprep.subr.bf16.mxu0 0
    %864 = vmatpush1.bf16.xpose.msra.mxu0 0
    %865 = vmatprep.subr.bf16.mxu0 0
    %866 = vmatpush1.bf16.xpose.msra.mxu0 0
    %867 = vmatprep.subr.bf16.mxu0 0
    %868 = vmatpush1.bf16.xpose.msra.mxu0 0
    %869 = vmatprep.subr.bf16.mxu0 0
    %870 = vmatpush1.bf16.xpose.msra.mxu0 0
    %871 = vmatprep.subr.bf16.mxu0 %v523
    %872 = vmatpush1.bf16.xpose.msra.mxu0 %v522
    %873 = vmatprep.subr.bf16.mxu0 %v504
    %874 = vmatpush1.bf16.xpose.msra.mxu0 %v503
    %875 = vmatprep.subr.bf16.mxu0 %v485
    %876 = vmatpush1.bf16.xpose.msra.mxu0 %v484
    %877 = vmatprep.subr.bf16.mxu0 %v466
    %878 = vmatpush1.bf16.xpose.msra.mxu0 %v465
    %879 = vmatprep.subr.bf16.mxu0 0
    %880 = vmatpush2.bf16.xpose.msra.mxu0 0
    %881 = vmatprep.subr.bf16.mxu0 0
    %882 = vmatpush2.bf16.xpose.msra.mxu0 0
    %883 = vmatprep.subr.bf16.mxu0 0
    %884 = vmatpush2.bf16.xpose.msra.mxu0 0
    %885 = vmatprep.subr.bf16.mxu0 0
    %886 = vmatpush2.bf16.xpose.msra.mxu0 0
    %887 = vmatprep.subr.bf16.mxu0 0
    %888 = vmatpush2.bf16.xpose.msra.mxu0 0
    %889 = vmatprep.subr.bf16.mxu0 0
    %890 = vmatpush2.bf16.xpose.msra.mxu0 0
    %891 = vmatprep.subr.bf16.mxu0 0
    %892 = vmatpush2.bf16.xpose.msra.mxu0 0
    %893 = vmatprep.subr.bf16.mxu0 0
    %894 = vmatpush2.bf16.xpose.msra.mxu0 0
    %895 = vmatprep.mubr.bf16.mxu0 %v226
    %896 = vmatmul.mubr.bf16.gmra.mxu0 %v225
    %v897 = vpop.f32.mrf.mxu0
    %v898 = vadd.f32 %v857, %v897
    %v899 = vpop.f32.mrf.mxu0
    %v900 = vpop.f32.mrf.mxu0
    %v901 = vadd.f32 %v860, %v900
    %v902 = vpop.f32.mrf.mxu0
    %903 = vdwg.mxu0
    %904 = vmatprep.subr.bf16.mxu0 0
    %905 = vmatpush1.bf16.xpose.msra.mxu0 0
    %906 = vmatprep.subr.bf16.mxu0 0
    %907 = vmatpush1.bf16.xpose.msra.mxu0 0
    %908 = vmatprep.subr.bf16.mxu0 0
    %909 = vmatpush1.bf16.xpose.msra.mxu0 0
    %910 = vmatprep.subr.bf16.mxu0 0
    %911 = vmatpush1.bf16.xpose.msra.mxu0 0
    %912 = vmatprep.subr.bf16.mxu0 %v525
    %913 = vmatpush1.bf16.xpose.msra.mxu0 %v524
    %914 = vmatprep.subr.bf16.mxu0 %v506
    %915 = vmatpush1.bf16.xpose.msra.mxu0 %v505
    %916 = vmatprep.subr.bf16.mxu0 %v487
    %917 = vmatpush1.bf16.xpose.msra.mxu0 %v486
    %918 = vmatprep.subr.bf16.mxu0 %v468
    %919 = vmatpush1.bf16.xpose.msra.mxu0 %v467
    %920 = vmatprep.subr.bf16.mxu0 0
    %921 = vmatpush2.bf16.xpose.msra.mxu0 0
    %922 = vmatprep.subr.bf16.mxu0 0
    %923 = vmatpush2.bf16.xpose.msra.mxu0 0
    %924 = vmatprep.subr.bf16.mxu0 0
    %925 = vmatpush2.bf16.xpose.msra.mxu0 0
    %926 = vmatprep.subr.bf16.mxu0 0
    %927 = vmatpush2.bf16.xpose.msra.mxu0 0
    %928 = vmatprep.subr.bf16.mxu0 0
    %929 = vmatpush2.bf16.xpose.msra.mxu0 0
    %930 = vmatprep.subr.bf16.mxu0 0
    %931 = vmatpush2.bf16.xpose.msra.mxu0 0
    %932 = vmatprep.subr.bf16.mxu0 0
    %933 = vmatpush2.bf16.xpose.msra.mxu0 0
    %934 = vmatprep.subr.bf16.mxu0 0
    %935 = vmatpush2.bf16.xpose.msra.mxu0 0
    %936 = vmatprep.mubr.bf16.mxu0 %v228
    %937 = vmatmul.mubr.bf16.gmra.mxu0 %v227
    %v938 = vpop.f32.mrf.mxu0
    %v939 = vadd.f32 %v898, %v938
    %v940 = vpop.f32.mrf.mxu0
    %v941 = vpop.f32.mrf.mxu0
    %v942 = vadd.f32 %v901, %v941
    %v943 = vpop.f32.mrf.mxu0
    %944 = vdwg.mxu0
    %945 = vmatprep.subr.bf16.mxu0 0
    %946 = vmatpush1.bf16.xpose.msra.mxu0 0
    %947 = vmatprep.subr.bf16.mxu0 0
    %948 = vmatpush1.bf16.xpose.msra.mxu0 0
    %949 = vmatprep.subr.bf16.mxu0 0
    %950 = vmatpush1.bf16.xpose.msra.mxu0 0
    %951 = vmatprep.subr.bf16.mxu0 0
    %952 = vmatpush1.bf16.xpose.msra.mxu0 0
    %953 = vmatprep.subr.bf16.mxu0 %v527
    %954 = vmatpush1.bf16.xpose.msra.mxu0 %v526
    %955 = vmatprep.subr.bf16.mxu0 %v508
    %956 = vmatpush1.bf16.xpose.msra.mxu0 %v507
    %957 = vmatprep.subr.bf16.mxu0 %v489
    %958 = vmatpush1.bf16.xpose.msra.mxu0 %v488
    %959 = vmatprep.subr.bf16.mxu0 %v470
    %960 = vmatpush1.bf16.xpose.msra.mxu0 %v469
    %961 = vmatprep.subr.bf16.mxu0 0
    %962 = vmatpush2.bf16.xpose.msra.mxu0 0
    %963 = vmatprep.subr.bf16.mxu0 0
    %964 = vmatpush2.bf16.xpose.msra.mxu0 0
    %965 = vmatprep.subr.bf16.mxu0 0
    %966 = vmatpush2.bf16.xpose.msra.mxu0 0
    %967 = vmatprep.subr.bf16.mxu0 0
    %968 = vmatpush2.bf16.xpose.msra.mxu0 0
    %969 = vmatprep.subr.bf16.mxu0 0
    %970 = vmatpush2.bf16.xpose.msra.mxu0 0
    %971 = vmatprep.subr.bf16.mxu0 0
    %972 = vmatpush2.bf16.xpose.msra.mxu0 0
    %973 = vmatprep.subr.bf16.mxu0 0
    %974 = vmatpush2.bf16.xpose.msra.mxu0 0
    %975 = vmatprep.subr.bf16.mxu0 0
    %976 = vmatpush2.bf16.xpose.msra.mxu0 0
    %977 = vmatprep.mubr.bf16.mxu0 %v230
    %978 = vmatmul.mubr.bf16.gmra.mxu0 %v229
    %v979 = vpop.f32.mrf.mxu0
    %v980 = vadd.f32 %v939, %v979
    %v981 = vpop.f32.mrf.mxu0
    %v982 = vpop.f32.mrf.mxu0
    %v983 = vadd.f32 %v942, %v982
    %v984 = vpop.f32.mrf.mxu0
    %985 = vdwg.mxu0
    %986 = vmatprep.subr.bf16.mxu0 0
    %987 = vmatpush1.bf16.xpose.msra.mxu0 0
    %988 = vmatprep.subr.bf16.mxu0 0
    %989 = vmatpush1.bf16.xpose.msra.mxu0 0
    %990 = vmatprep.subr.bf16.mxu0 0
    %991 = vmatpush1.bf16.xpose.msra.mxu0 0
    %992 = vmatprep.subr.bf16.mxu0 0
    %993 = vmatpush1.bf16.xpose.msra.mxu0 0
    %994 = vmatprep.subr.bf16.mxu0 0
    %995 = vmatpush1.bf16.xpose.msra.mxu0 %v615
    %996 = vmatprep.subr.bf16.mxu0 0
    %997 = vmatpush1.bf16.xpose.msra.mxu0 %v612
    %998 = vmatprep.subr.bf16.mxu0 0
    %999 = vmatpush1.bf16.xpose.msra.mxu0 %v609
    %1000 = vmatprep.subr.bf16.mxu0 0
    %1001 = vmatpush1.bf16.xpose.msra.mxu0 %v606
    %1002 = vmatprep.subr.bf16.mxu0 0
    %1003 = vmatpush2.bf16.xpose.msra.mxu0 0
    %1004 = vmatprep.subr.bf16.mxu0 0
    %1005 = vmatpush2.bf16.xpose.msra.mxu0 0
    %1006 = vmatprep.subr.bf16.mxu0 0
    %1007 = vmatpush2.bf16.xpose.msra.mxu0 0
    %1008 = vmatprep.subr.bf16.mxu0 0
    %1009 = vmatpush2.bf16.xpose.msra.mxu0 0
    %1010 = vmatprep.subr.bf16.mxu0 0
    %1011 = vmatpush2.bf16.xpose.msra.mxu0 0
    %1012 = vmatprep.subr.bf16.mxu0 0
    %1013 = vmatpush2.bf16.xpose.msra.mxu0 0
    %1014 = vmatprep.subr.bf16.mxu0 0
    %1015 = vmatpush2.bf16.xpose.msra.mxu0 0
    %1016 = vmatprep.subr.bf16.mxu0 0
    %1017 = vmatpush2.bf16.xpose.msra.mxu0 0
    %1018 = vmatprep.mubr.bf16.mxu0 0
    %1019 = vmatmul.mubr.bf16.gmra.mxu0 %v603
    %v1020 = vpop.f32.mrf.mxu0
    %v1021 = vadd.f32 %v980, %v1020
    %v1022 = vpop.f32.mrf.mxu0
    %v1023 = vpop.f32.mrf.mxu0
    %v1024 = vadd.f32 %v983, %v1023
    %v1025 = vpop.f32.mrf.mxu0
    %1026 = vdwg.mxu0
    %v1027 = vmax.f32 %v1021, 0.0
    %v1028 = vmax.f32 %v1024, 0.0
    %v1029 = vpack.c.bf16 %v1028, %v1027
    %v1030 = vld [vmem:[#allocation7] sm:$0xf]
    %v1031 = vld [vmem:[#allocation7 + $0x4] sm:$0xf]
    %v1032 = vld [vmem:[#allocation7 + $0x8] sm:$0xf]
    %v1033 = vld [vmem:[#allocation7 + $0xc] sm:$0xf]
    %v1034 = vld [vmem:[#allocation7 + $0x10] sm:$0xf]
    %v1035 = vld [vmem:[#allocation7 + $0x14] sm:$0xf]
    %v1036 = vld [vmem:[#allocation7 + $0x18] sm:$0x1]
    %v1037 = vld [vmem:[%s3 + $0x1] sm:$0x1]
    %v1038 = vlaneseq
    %v1039 = vshrl.u32 %v1038, 7
    %v1040 = vsub.s32 0, %v1039
    %v1041 = vrot.slane %v1037, %v1040
    %v1049 = vunpack.c.l.b16 %v1030
    %v1050 = vunpack.c.l.b16 %v1031
    %v1051 = vunpack.c.l.b16 %v1032
    %v1052 = vunpack.c.l.b16 %v1033
    %v1053 = vunpack.c.l.b16 %v1034
    %v1054 = vunpack.c.l.b16 %v1035
    %v1055 = vunpack.c.l.b16 %v1036
    %v1056 = vpack.c.b16 %v1050, %v1049
    %v1057 = vpack.c.b16 %v1052, %v1051
    %v1058 = vpack.c.b16 %v1054, %v1053
    %v1059 = vpack.c.b16 %v1055, %v1055
    %vm1063 = vcmask 408576
    %v1065 = vsel %vm1063, %v1029, 0
    %vm1067 = vcmask 1040384
    %v1069 = vsel %vm1067, %v1059, 0
    %1071 = vmatprep.subr.bf16.mxu0 0
    %1072 = vmatpush1.bf16.msra.mxu0 0
    %1073 = vmatprep.subr.bf16.mxu0 0
    %1074 = vmatpush1.bf16.msra.mxu0 0
    %1075 = vmatprep.subr.bf16.mxu0 0
    %1076 = vmatpush1.bf16.msra.mxu0 0
    %1077 = vmatprep.subr.bf16.mxu0 0
    %1078 = vmatpush1.bf16.msra.mxu0 0
    %1079 = vmatprep.subr.bf16.mxu0 0
    %1080 = vmatpush1.bf16.msra.mxu0 %v1069
    %1081 = vmatprep.subr.bf16.mxu0 0
    %1082 = vmatpush1.bf16.msra.mxu0 %v1058
    %1083 = vmatprep.subr.bf16.mxu0 0
    %1084 = vmatpush1.bf16.msra.mxu0 %v1057
    %1085 = vmatprep.subr.bf16.mxu0 0
    %1086 = vmatpush1.bf16.msra.mxu0 %v1056
    %1087 = vmatprep.subr.bf16.mxu0 0
    %1088 = vmatpush2.bf16.msra.mxu0 0
    %1089 = vmatprep.subr.bf16.mxu0 0
    %1090 = vmatpush2.bf16.msra.mxu0 0
    %1091 = vmatprep.subr.bf16.mxu0 0
    %1092 = vmatpush2.bf16.msra.mxu0 0
    %1093 = vmatprep.subr.bf16.mxu0 0
    %1094 = vmatpush2.bf16.msra.mxu0 0
    %1095 = vmatprep.subr.bf16.mxu0 0
    %1096 = vmatpush2.bf16.msra.mxu0 0
    %1097 = vmatprep.subr.bf16.mxu0 0
    %1098 = vmatpush2.bf16.msra.mxu0 0
    %1099 = vmatprep.subr.bf16.mxu0 0
    %1100 = vmatpush2.bf16.msra.mxu0 0
    %1101 = vmatprep.subr.bf16.mxu0 0
    %1102 = vmatpush2.bf16.msra.mxu0 0
    %1103 = vmatprep.mubr.bf16.mxu0 0
    %1104 = vmatmul.mubr.bf16.gmra.mxu0 %v1065
    %v1105 = vpop.f32.mrf.mxu0
    %v1106 = vadd.f32 %v1041, %v1105
    %v1107 = vpop.f32.mrf.mxu0
    %v1108 = vpop.f32.mrf.mxu0
    %v1109 = vadd.f32 %v1041, %v1108
    %v1110 = vpop.f32.mrf.mxu0
    %1111 = vdwg.mxu0
    %v1112 = vmax.f32 %v1106, 0.0
    %v1113 = vmax.f32 %v1109, 0.0
    %v1114 = vpack.c.bf16 %v1113, %v1112
    %v1115 = vld [vmem:[#allocation7 + $0x20] sm:$0xf]
    %v1116 = vld [vmem:[#allocation7 + $0x24] sm:$0xf]
    %v1117 = vld [vmem:[#allocation7 + $0x28] sm:$0xf]
    %v1118 = vld [vmem:[#allocation7 + $0x2c] sm:$0xf]
    %v1119 = vld [vmem:[#allocation7 + $0x30] sm:$0xf]
    %v1120 = vld [vmem:[#allocation7 + $0x34] sm:$0xf]
    %v1121 = vld [vmem:[#allocation7 + $0x38] sm:$0x1]
    %v1122 = vld [vmem:[%s3 + $0x2] sm:$0x1]
    %v1123 = vlaneseq
    %v1124 = vshrl.u32 %v1123, 7
    %v1125 = vsub.s32 0, %v1124
    %v1126 = vrot.slane %v1122, %v1125
    %v1134 = vunpack.c.l.b16 %v1115
    %v1135 = vunpack.c.l.b16 %v1116
    %v1136 = vunpack.c.l.b16 %v1117
    %v1137 = vunpack.c.l.b16 %v1118
    %v1138 = vunpack.c.l.b16 %v1119
    %v1139 = vunpack.c.l.b16 %v1120
    %v1140 = vunpack.c.l.b16 %v1121
    %v1141 = vpack.c.b16 %v1135, %v1134
    %v1142 = vpack.c.b16 %v1137, %v1136
    %v1143 = vpack.c.b16 %v1139, %v1138
    %v1144 = vpack.c.b16 %v1140, %v1140
    %v1149 = vsel %vm1063, %v1114, 0
    %v1152 = vsel %vm1067, %v1144, 0
    %1154 = vmatprep.subr.bf16.mxu0 0
    %1155 = vmatpush1.bf16.msra.mxu0 0
    %1156 = vmatprep.subr.bf16.mxu0 0
    %1157 = vmatpush1.bf16.msra.mxu0 0
    %1158 = vmatprep.subr.bf16.mxu0 0
    %1159 = vmatpush1.bf16.msra.mxu0 0
    %1160 = vmatprep.subr.bf16.mxu0 0
    %1161 = vmatpush1.bf16.msra.mxu0 0
    %1162 = vmatprep.subr.bf16.mxu0 0
    %1163 = vmatpush1.bf16.msra.mxu0 %v1152
    %1164 = vmatprep.subr.bf16.mxu0 0
    %1165 = vmatpush1.bf16.msra.mxu0 %v1143
    %1166 = vmatprep.subr.bf16.mxu0 0
    %1167 = vmatpush1.bf16.msra.mxu0 %v1142
    %1168 = vmatprep.subr.bf16.mxu0 0
    %1169 = vmatpush1.bf16.msra.mxu0 %v1141
    %1170 = vmatprep.subr.bf16.mxu0 0
    %1171 = vmatpush2.bf16.msra.mxu0 0
    %1172 = vmatprep.subr.bf16.mxu0 0
    %1173 = vmatpush2.bf16.msra.mxu0 0
    %1174 = vmatprep.subr.bf16.mxu0 0
    %1175 = vmatpush2.bf16.msra.mxu0 0
    %1176 = vmatprep.subr.bf16.mxu0 0
    %1177 = vmatpush2.bf16.msra.mxu0 0
    %1178 = vmatprep.subr.bf16.mxu0 0
    %1179 = vmatpush2.bf16.msra.mxu0 0
    %1180 = vmatprep.subr.bf16.mxu0 0
    %1181 = vmatpush2.bf16.msra.mxu0 0
    %1182 = vmatprep.subr.bf16.mxu0 0
    %1183 = vmatpush2.bf16.msra.mxu0 0
    %1184 = vmatprep.subr.bf16.mxu0 0
    %1185 = vmatpush2.bf16.msra.mxu0 0
    %1186 = vmatprep.mubr.bf16.mxu0 0
    %1187 = vmatmul.mubr.bf16.gmra.mxu0 %v1149
    %v1188 = vpop.f32.mrf.mxu0
    %v1189 = vadd.f32 %v1126, %v1188
    %v1190 = vpop.f32.mrf.mxu0
    %v1191 = vpop.f32.mrf.mxu0
    %v1192 = vadd.f32 %v1126, %v1191
    %v1193 = vpop.f32.mrf.mxu0
    %1194 = vdwg.mxu0
    %v1195 = vmax.f32 %v1189, 0.0
    %v1196 = vmax.f32 %v1192, 0.0
    %v1197 = vld [vmem:[#allocation7 + $0x40] sm:$0xf]
    %v1198 = vld [vmem:[#allocation7 + $0x44] sm:$0xf]
    %v1199 = vpack.c.bf16 %v1196, %v1195
    %v1200 = vld [vmem:[%s3 + $0x3] sm:$0x1]
    %v1201 = vlaneseq
    %v1202 = vshrl.u32 %v1201, 7
    %v1203 = vsub.s32 0, %v1202
    %v1204 = vrot.slane %v1200, %v1203
    %v1207 = vunpack.c.l.b16 %v1197
    %v1208 = vunpack.c.l.b16 %v1198
    %v1209 = vpack.c.b16 %v1208, %v1207
    %vm1211 = vcmask 130048
    %v1213 = vsel %vm1211, %v1199, 0
    %1215 = vmatprep.subr.bf16.mxu0 0
    %1216 = vmatpush1.bf16.msra.mxu0 0
    %1217 = vmatprep.subr.bf16.mxu0 0
    %1218 = vmatpush1.bf16.msra.mxu0 0
    %1219 = vmatprep.subr.bf16.mxu0 0
    %1220 = vmatpush1.bf16.msra.mxu0 0
    %1221 = vmatprep.subr.bf16.mxu0 0
    %1222 = vmatpush1.bf16.msra.mxu0 0
    %1223 = vmatprep.subr.bf16.mxu0 0
    %1224 = vmatpush1.bf16.msra.mxu0 0
    %1225 = vmatprep.subr.bf16.mxu0 0
    %1226 = vmatpush1.bf16.msra.mxu0 0
    %1227 = vmatprep.subr.bf16.mxu0 0
    %1228 = vmatpush1.bf16.msra.mxu0 0
    %1229 = vmatprep.subr.bf16.mxu0 0
    %1230 = vmatpush1.bf16.msra.mxu0 %v1209
    %1231 = vmatprep.subr.bf16.mxu0 0
    %1232 = vmatpush2.bf16.msra.mxu0 0
    %1233 = vmatprep.subr.bf16.mxu0 0
    %1234 = vmatpush2.bf16.msra.mxu0 0
    %1235 = vmatprep.subr.bf16.mxu0 0
    %1236 = vmatpush2.bf16.msra.mxu0 0
    %1237 = vmatprep.subr.bf16.mxu0 0
    %1238 = vmatpush2.bf16.msra.mxu0 0
    %1239 = vmatprep.subr.bf16.mxu0 0
    %1240 = vmatpush2.bf16.msra.mxu0 0
    %1241 = vmatprep.subr.bf16.mxu0 0
    %1242 = vmatpush2.bf16.msra.mxu0 0
    %1243 = vmatprep.subr.bf16.mxu0 0
    %1244 = vmatpush2.bf16.msra.mxu0 0
    %1245 = vmatprep.subr.bf16.mxu0 0
    %1246 = vmatpush2.bf16.msra.mxu0 0
    %1247 = vmatprep.mubr.bf16.mxu0 0
    %1248 = vmatmul.mubr.bf16.gmra.mxu0 %v1213
    %v1249 = vpop.f32.mrf.mxu0
    %v1250 = vadd.f32 %v1204, %v1249
    %v1251 = vpop.f32.mrf.mxu0
    %v1252 = vpop.f32.mrf.mxu0
    %v1253 = vadd.f32 %v1204, %v1252
    %v1254 = vpop.f32.mrf.mxu0
    %1255 = vdwg.mxu0
    %1256 = vst.msk [vmem:[#allocation8] sm:$0xff] %vm1211, %v1195
    %1257 = vst.msk [vmem:[#allocation8 + $0x8] sm:$0xff] %vm1211, %v1196
    %1260 = vrot.lane.b32.xlu0 %v1250, 16
    %v1261 = vpop.permute.xlu0 %1260
    %1262 = vrot.lane.b32.xlu0 %v1253, 16
    %v1263 = vpop.permute.xlu0 %1262
    %vm1266 = vcmask 212096
    %1267 = vst.msk [vmem:[#allocation8] sm:$0xff] %vm1266, %v1261
    %1268 = vst.msk [vmem:[#allocation8 + $0x8] sm:$0xff] %vm1266, %v1263
    // Predicated region
    $region30: #{tpu_custom_call.1} parent=1 // pred_check
      _
    $region31: #{tpu_custom_call.1} parent=1 // pred_check_branch
      %1270 = sbr.rel (0) target = $region33
    $region32: #{tpu_custom_call.1} parent=1 // pred_region
      %s1272 = ssub.s32 256, 256
      %1273 = vsyncadd [#allocation4], %s1272
      %s1274 = sshll.u32 [#allocation8], 4
      %s1275 = int_to_ptr.vmem [resolvable:$true] %s1274
      %1280 = dma.vmem_to_hbm [thread:$0]  %s1275, 256, %s4, [#allocation4], 128, 128, 8
    $region33: #{tpu_custom_call.1} parent=1 // pred_fallthru
      _
    // Predicated region
    $region34: #{tpu_custom_call.1} parent=1 // pred_check
      _
    $region35: #{tpu_custom_call.1} parent=1 // pred_check_branch
      %1282 = sbr.rel (0) target = $region37
    $region36: #{tpu_custom_call.1} parent=1 // pred_region
      %1283 = dma.done [#allocation4], 256
    $region37: #{tpu_custom_call.1} parent=1 // pred_fallthru
      _
    %1284 = vsyncpa [#allocation3], 1
    %1285 = vsyncpa [#allocation6], 1
    %1286 = vsyncpa [#allocation4], 1

</llo_original>
